<compile_context>
chip_gen: v6e
topology: v6e:2x2x1
jax: 0.10.0
libtpu: 0.0.40
codegen_flags: <defaults>
</compile_context>

<pallas_src>
import jax
import jax.numpy as jnp
from jax.experimental import pallas as pl
from jax.experimental.pallas import tpu as pltpu


def _affine_kernel(k_ref, b_ref, solid_ref, x_ref, o_ref):
    # k/b/solid are (1,) f32 scalars resident in SMEM; x/o are VMEM row tiles.
    k = k_ref[0]
    c = b_ref[0] + solid_ref[0]          # fold the two scalar adds (scalar path)
    o_ref[...] = k * x_ref[...] + c      # 1 vmul + 1 vadd per vreg


def _pick_row_tile(n_rows, n_cols, itemsize, target_bytes=2 * 1024 * 1024):
    """Row tile: multiple of 8 sublanes, ~target_bytes per buffer, capped at N."""
    rows = max(8, target_bytes // max(1, n_cols * itemsize))
    rows = (rows // 8) * 8
    if rows >= n_rows:
        return n_rows                    # full-extent block always satisfies tiling rules
    return max(8, rows)


def linear_regression_forward(x, k, b, solid, *, tile_n=None):
    """x: [N, D] float32. Returns [N, 1, D] float32 = k * x.unsqueeze(1) + b + solid."""
    N, D = x.shape
    if tile_n is None:
        tile_n = _pick_row_tile(N, D, x.dtype.itemsize)
    else:
        tile_n = min(tile_n, N)
        if tile_n < N:
            tile_n = max(8, (tile_n // 8) * 8)

    grid = (pl.cdiv(N, tile_n),)

    out2d = pl.pallas_call(
        _affine_kernel,
        out_shape=jax.ShapeDtypeStruct((N, D), x.dtype),
        grid_spec=pl.GridSpec(
            grid=grid,
            in_specs=[
                pl.BlockSpec(memory_space=pltpu.SMEM),          # k     (1,)
                pl.BlockSpec(memory_space=pltpu.SMEM),          # b     (1,)
                pl.BlockSpec(memory_space=pltpu.SMEM),          # solid (1,)
                pl.BlockSpec((tile_n, D), lambda i: (i, 0)),    # x row tile
            ],
            out_specs=pl.BlockSpec((tile_n, D), lambda i: (i, 0)),
        ),
        compiler_params=pltpu.CompilerParams(
            dimension_semantics=("parallel",),                  # shard rows across TCs (v7x)
        ),
    )(k, b, solid, x)

    # unsqueeze(1): [N, D] -> [N, 1, D] (metadata only, done in plain JAX)
    return out2d.reshape(N, 1, D)


if __name__ == "__main__":
    key = jax.random.PRNGKey(0)
    kx, kk, kb, kx2 = jax.random.split(key, 4)

    # Deterministic parameter init (mirrors nn.Parameter(torch.randn(1)) shapes).
    k = jax.random.normal(kk, (1,), dtype=jnp.float32)
    b = jax.random.normal(kb, (1,), dtype=jnp.float32)
    solid = jnp.array([0.6], dtype=jnp.float32)  # requires_grad=False constant

    # Small input consistent with the module: a batch of feature rows.
    N, D = 8, 128
    x = jax.random.normal(kx, (N, D), dtype=jnp.float32)

    out = linear_regression_forward(x, k, b, solid)
    out = jax.block_until_ready(out)
    ref = k[0] * x[:, None, :] + b[0] + solid[0]
    assert out.shape == (N, 1, D), out.shape
    assert jnp.allclose(out, ref, atol=1e-6), "mismatch vs reference (small)"

    # Second check exercising the multi-step row-tiled grid path.
    N2, D2 = 1024, 128
    x2 = jax.random.normal(kx2, (N2, D2), dtype=jnp.float32)
    out2 = linear_regression_forward(x2, k, b, solid, tile_n=256)  # grid=(4,)
    out2 = jax.block_until_ready(out2)
    ref2 = k[0] * x2[:, None, :] + b[0] + solid[0]
    assert out2.shape == (N2, 1, D2), out2.shape
    assert jnp.allclose(out2, ref2, atol=1e-6), "mismatch vs reference (tiled)"

    print("KERNEL_OK")
</pallas_src>

<mosaic_0001>
module attributes {stable_mosaic.version = 11 : i64} {
  func.func @_affine_kernel(%arg0: i32, %arg1: memref<1xf32, #tpu.memory_space<smem>>, %arg2: memref<1xf32, #tpu.memory_space<smem>>, %arg3: memref<1xf32, #tpu.memory_space<smem>>, %arg4: memref<8x128xf32, #tpu.memory_space<vmem>>, %arg5: memref<8x128xf32, #tpu.memory_space<vmem>>) attributes {dimension_semantics = [#tpu.dimension_semantics<parallel>], iteration_bounds = array<i64: 1>, scalar_prefetch = 0 : i64, scratch_operands = 0 : i64, tpu.core_type = #tpu.core_type<tc>, window_params = [{transform_indices = @transform_0, window_bounds = array<i64: 1>}, {transform_indices = @transform_1, window_bounds = array<i64: 1>}, {transform_indices = @transform_2, window_bounds = array<i64: 1>}, {transform_indices = @transform_3, window_bounds = array<i64: 8, 128>}, {transform_indices = @transform_4, window_bounds = array<i64: 8, 128>}]} {
    %c0 = arith.constant 0 : index
    %0 = memref.load %arg1[%c0] : memref<1xf32, #tpu.memory_space<smem>>
    %c0_0 = arith.constant 0 : index
    %1 = memref.load %arg2[%c0_0] : memref<1xf32, #tpu.memory_space<smem>>
    %c0_1 = arith.constant 0 : index
    %2 = memref.load %arg3[%c0_1] : memref<1xf32, #tpu.memory_space<smem>>
    %3 = arith.addf %1, %2 : f32
    %c0_2 = arith.constant 0 : index
    %c0_3 = arith.constant 0 : index
    %4 = vector.load %arg4[%c0_2, %c0_3] : memref<8x128xf32, #tpu.memory_space<vmem>>, vector<8x128xf32>
    %5 = vector.broadcast %0 : f32 to vector<8x128xf32>
    %6 = arith.mulf %5, %4 : vector<8x128xf32>
    %7 = vector.broadcast %3 : f32 to vector<8x128xf32>
    %8 = arith.addf %6, %7 : vector<8x128xf32>
    %c0_4 = arith.constant 0 : index
    %c0_5 = arith.constant 0 : index
    %9 = vector.load %arg5[%c0_4, %c0_5] : memref<8x128xf32, #tpu.memory_space<vmem>>, vector<8x128xf32>
    tpu.vector_store %arg5[%c0_4, %c0_5], %8 {strides = array<i32>} : memref<8x128xf32, #tpu.memory_space<vmem>>, vector<8x128xf32>,
    return
  }
  func.func @transform_0(%arg0: i32) -> i32 {
    %c0_i32 = arith.constant 0 : i32
    %c0_i32_0 = arith.constant 0 : i32
    return %c0_i32 : i32
  }
  func.func @transform_1(%arg0: i32) -> i32 {
    %c0_i32 = arith.constant 0 : i32
    %c0_i32_0 = arith.constant 0 : i32
    return %c0_i32 : i32
  }
  func.func @transform_2(%arg0: i32) -> i32 {
    %c0_i32 = arith.constant 0 : i32
    %c0_i32_0 = arith.constant 0 : i32
    return %c0_i32 : i32
  }
  func.func @transform_3(%arg0: i32) -> (i32, i32) {
    %c0_i32 = arith.constant 0 : i32
    %c0_i32_0 = arith.constant 0 : i32
    return %arg0, %c0_i32 : i32, i32
  }
  func.func @transform_4(%arg0: i32) -> (i32, i32) {
    %c0_i32 = arith.constant 0 : i32
    %c0_i32_0 = arith.constant 0 : i32
    return %arg0, %c0_i32 : i32, i32
  }
}

</mosaic_0001>

<llo_original>
// kernel: tpu_custom_call.1
$region0: #{tpu_custom_call.1}
  #allocation0 [shape = 'u32[]', space=smem, size = 0x4, offset = 0x4, fixed_abs, tag = 'smem constant byte address 0x4 - core index']
  #allocation1 [shape = 'u32[144,128]{1,0:T(1,128)}', space=vmem, size = 0x12000, scoped, tag = 'internal scratch']
  #allocation2 [shape = 'f32[1]{0:T(128)S(6)}', space=smem, size = 0x200, scoped, tag = 'scoped memory for tpu_custom_call.1']
  #allocation3 [shape = 'f32[1]{0:T(128)S(6)}', space=smem, size = 0x200, scoped, tag = 'scoped memory for tpu_custom_call.1']
  #allocation4 [shape = 'f32[1]{0:T(128)S(6)}', space=smem, size = 0x200, scoped, tag = 'scoped memory for tpu_custom_call.1']
  %s0 = inlined_call_operand.<no memory space> [shape: f32[1], index: 0, kind: input, shape index: {}]
  %s1 = inlined_call_operand.<no memory space> [shape: f32[1], index: 1, kind: input, shape index: {}]
  %s2 = inlined_call_operand.<no memory space> [shape: f32[1], index: 2, kind: input, shape index: {}]
  %s3 = inlined_call_operand.hbm [shape: f32[8,128], index: 3, kind: input, shape index: {}]
  %s4 = inlined_call_operand.hbm [shape: f32[8,128], index: 4, kind: output, shape index: {}]
  %s5 = sld [smem:[#allocation0]]
  $region30: #{tpu_custom_call.1} parent=0
    _
  %s7 = ssub.s32 1, %s5
  %s8 = scalar_select 0, %s7, %s5
  %9 = sst [smem:[#allocation2]] %s0
  %10 = sst [smem:[#allocation3]] %s1
  %11 = sst [smem:[#allocation4]] %s2
  $region1: #{tpu_custom_call.1} parent=0
    #allocation5 [shape = 'u8[4096]{0}', space=vmem, size = 0x1000, scoped, tag = 'input window, operand 3, single buffered']
    #allocation6 [shape = 's32[1]{0}', space=sflag, size = 0x4, scoped, tag = 'scoped memory for tpu_custom_call.1']
    #allocation7 [shape = 's32[1]{0}', space=sflag, size = 0x4, scoped, tag = 'scoped memory for tpu_custom_call.1']
    #allocation8 [shape = 'u8[4096]{0}', space=vmem, size = 0x1000, scoped, tag = 'output window, operand 0, single buffered']
    %12 = vsyncpa [#allocation6], 0
    %13 = vsyncpa [#allocation7], 0
    // Predicated region
    $region2: #{tpu_custom_call.1} parent=1 // pred_check
      _
    $region3: #{tpu_custom_call.1} parent=1 // pred_check_branch
      %15 = sbr.rel (0) target = $region5
    $region4: #{tpu_custom_call.1} parent=1 // pred_region
      _
    $region5: #{tpu_custom_call.1} parent=1 // pred_fallthru
      _
    // Predicated region
    $region6: #{tpu_custom_call.1} parent=1 // pred_check
      _
    $region7: #{tpu_custom_call.1} parent=1 // pred_check_branch
      %17 = sbr.rel (0) target = $region9
    $region8: #{tpu_custom_call.1} parent=1 // pred_region
      _
    $region9: #{tpu_custom_call.1} parent=1 // pred_fallthru
      _
    // Predicated region
    $region10: #{tpu_custom_call.1} parent=1 // pred_check
      _
    $region11: #{tpu_custom_call.1} parent=1 // pred_check_branch
      %19 = sbr.rel (0) target = $region13
    $region12: #{tpu_custom_call.1} parent=1 // pred_region
      _
    $region13: #{tpu_custom_call.1} parent=1 // pred_fallthru
      _
    // Predicated region
    $region14: #{tpu_custom_call.1} parent=1 // pred_check
      _
    $region15: #{tpu_custom_call.1} parent=1 // pred_check_branch
      %21 = sbr.rel (0) target = $region17
    $region16: #{tpu_custom_call.1} parent=1 // pred_region
      %s23 = ssub.s32 128, 128
      %24 = vsyncadd [#allocation6], %s23
      %s26 = sshll.u32 [#allocation5], 4
      %s27 = int_to_ptr.vmem [resolvable:$true] %s26
      %29 = dma.hbm_to_vmem [thread:$0]  %s3, 128, %s27, [#allocation6]
    $region17: #{tpu_custom_call.1} parent=1 // pred_fallthru
      _
    // Predicated region
    $region18: #{tpu_custom_call.1} parent=1 // pred_check
      _
    $region19: #{tpu_custom_call.1} parent=1 // pred_check_branch
      %31 = sbr.rel (0) target = $region21
    $region20: #{tpu_custom_call.1} parent=1 // pred_region
      %32 = dma.done [#allocation6], 128
    $region21: #{tpu_custom_call.1} parent=1 // pred_fallthru
      _
    %s33 = sld [smem:[#allocation2]]
    %s34 = sld [smem:[#allocation3]]
    %s35 = sld [smem:[#allocation4]]
    %s36 = sadd.f32 %s34, %s35
    %v37 = vld [vmem:[#allocation5] sm:$0xff]
    %v38 = vstv %s33
    %v39 = vmul.f32 %v38, %v37
    %v40 = vstv %s36
    %v41 = vadd.f32 %v39, %v40
    %42 = vst [vmem:[#allocation8] sm:$0xff] %v41
    // Predicated region
    $region22: #{tpu_custom_call.1} parent=1 // pred_check
      _
    $region23: #{tpu_custom_call.1} parent=1 // pred_check_branch
      %44 = sbr.rel (0) target = $region25
    $region24: #{tpu_custom_call.1} parent=1 // pred_region
      %s46 = ssub.s32 128, 128
      %47 = vsyncadd [#allocation7], %s46
      %s49 = sshll.u32 [#allocation8], 4
      %s50 = int_to_ptr.vmem [resolvable:$true] %s49
      %52 = dma.vmem_to_hbm [thread:$0]  %s50, 128, %s4, [#allocation7]
    $region25: #{tpu_custom_call.1} parent=1 // pred_fallthru
      _
    // Predicated region
    $region26: #{tpu_custom_call.1} parent=1 // pred_check
      _
    $region27: #{tpu_custom_call.1} parent=1 // pred_check_branch
      %54 = sbr.rel (0) target = $region29
    $region28: #{tpu_custom_call.1} parent=1 // pred_region
      %55 = dma.done [#allocation7], 128
    $region29: #{tpu_custom_call.1} parent=1 // pred_fallthru
      _
    %56 = vsyncpa [#allocation6], 1
    %57 = vsyncpa [#allocation7], 1

</llo_original>
